<compile_context>
chip_gen: v5e
topology: v5e:2x2
jax: 0.10.0
libtpu: 0.0.40
codegen_flags: <defaults>
</compile_context>

<pallas_src>
import functools
import math

import jax
import jax.numpy as jnp
from jax.experimental import pallas as pl
from jax.experimental.pallas import tpu as pltpu


# ----------------------------------------------------------------------------
# Pre-pass: row-wise L2 normalization (done once per operand, not per tile of
# the other grid axis), output in the matmul compute dtype (bf16).
# ----------------------------------------------------------------------------
def _l2_normalize_kernel(x_ref, o_ref):
    x = x_ref[...].astype(jnp.float32)
    # F.normalize: x / max(||x||_2, 1e-12)  ==  x * rsqrt(max(sum(x*x), 1e-24))
    sumsq = jnp.sum(x * x, axis=-1, keepdims=True)
    o_ref[...] = (x * jax.lax.rsqrt(jnp.maximum(sumsq, 1e-24))).astype(o_ref.dtype)


def _l2_normalize_rows(x, tile_rows, out_dtype):
    rows, d = x.shape
    return pl.pallas_call(
        _l2_normalize_kernel,
        out_shape=jax.ShapeDtypeStruct((rows, d), out_dtype),
        grid=(rows // tile_rows,),
        in_specs=[pl.BlockSpec((tile_rows, d), lambda i: (i, 0))],
        out_specs=pl.BlockSpec((tile_rows, d), lambda i: (i, 0)),
        compiler_params=pltpu.CompilerParams(
            dimension_semantics=("parallel",)),
    )(x)


# ----------------------------------------------------------------------------
# Main kernel: cosine matmul + ArcFace margin epilogue on one (TB, TC) tile.
# ----------------------------------------------------------------------------
def _arc_margin_kernel(xn_ref, wn_ref, label_ref, out_ref, *,
                       s, cos_m, sin_m, th, mm, easy_margin, ls_eps,
                       out_features, tile_c):
    xn = xn_ref[...]                 # (TB, D) bf16, already L2-normalized
    wn = wn_ref[...]                 # (TC, D) bf16, already L2-normalized
    lbl = label_ref[...]             # (TB, 1) int32

    # cosine = xn @ wn^T via (1,1) contraction -> no explicit transpose of wn.
    cos = jax.lax.dot_general(
        xn, wn, dimension_numbers=(((1,), (1,)), ((), ())),
        preferred_element_type=jnp.float32)               # (TB, TC) f32
    # Numerical guard: bf16 rounding can push |cos| a hair past 1 (PyTorch would
    # produce NaN there; clamping is the standard stable ArcFace formulation).
    cos = jnp.clip(cos, -1.0, 1.0)

    sine = jnp.sqrt(jnp.maximum(1.0 - cos * cos, 0.0))
    phi = cos * cos_m - sine * sin_m
    if easy_margin:
        phi = jnp.where(cos > 0.0, phi, cos)
    else:
        phi = jnp.where(cos > th, phi, cos - mm)

    tb, tc = cos.shape
    # Global class index = in-tile iota + C-tile origin (needed once C is tiled).
    col = (jax.lax.broadcasted_iota(jnp.int32, (tb, tc), 1)
           + pl.program_id(1) * tile_c)
    one_hot = (col == lbl).astype(jnp.float32)
    if ls_eps > 0.0:
        one_hot = (1.0 - ls_eps) * one_hot + ls_eps / out_features

    out = one_hot * phi + (1.0 - one_hot) * cos
    out_ref[...] = (out * s).astype(out_ref.dtype)


def _round_up(v, m):
    return ((v + m - 1) // m) * m


def arc_margin_product(x, weight, label, *, s=30.0, m=0.5, easy_margin=False,
                       ls_eps=0.0, tile_b=256, tile_c=1024,
                       compute_dtype=jnp.bfloat16):
    """ArcMarginProduct.forward(input, label) on TPU via Pallas.

    x: (B, D) float, weight: (C, D) float, label: (B,) int.  Returns (B, C) f32.
    Defaults tile_b/tile_c are sized for v7x's 64 MiB VMEM; on v5e/v6e larger
    tile_c (4096-8192) keeps the weight stream closer to the HBM roofline.
    """
    b, d = x.shape
    c, d2 = weight.shape
    assert d == d2, "in_features mismatch"

    cos_m = math.cos(m)
    sin_m = math.sin(m)
    th = math.cos(math.pi - m)
    mm = math.sin(math.pi - m) * m

    # Lane/sublane-friendly tiles: B tiles multiple of 8, C tiles multiple of 128.
    tile_b = min(tile_b, _round_up(b, 8))
    tile_c = min(tile_c, _round_up(c, 128))
    b_pad = _round_up(b, tile_b)
    c_pad = _round_up(c, tile_c)

    x_p = jnp.pad(x, ((0, b_pad - b), (0, 0))) if b_pad != b else x
    w_p = jnp.pad(weight, ((0, c_pad - c), (0, 0))) if c_pad != c else weight
    lbl_p = jnp.pad(label.astype(jnp.int32).reshape(b, 1),
                    ((0, b_pad - b), (0, 0)))

    # Normalize each operand exactly once (not per tile of the other axis).
    xn = _l2_normalize_rows(x_p, tile_b, compute_dtype)
    wn = _l2_normalize_rows(w_p, tile_c, compute_dtype)

    kernel = functools.partial(
        _arc_margin_kernel, s=float(s), cos_m=cos_m, sin_m=sin_m, th=th, mm=mm,
        easy_margin=bool(easy_margin), ls_eps=float(ls_eps),
        out_features=float(c), tile_c=tile_c)

    grid = (b_pad // tile_b, c_pad // tile_c)
    itemsize = jnp.dtype(compute_dtype).itemsize

    # Rough VMEM budget: double-buffered input/output tiles + f32 epilogue
    # temporaries; clamp into [32 MiB, 64 MiB] so it is valid on v7x as well.
    vmem_need = (2 * (tile_b * d + tile_c * d) * itemsize   # xn/wn tiles (x2 buf)
                 + 2 * tile_b * 4                           # label tile
                 + 6 * tile_b * tile_c * 4                  # out tile + f32 temps
                 + (2 << 20))
    vmem_limit = int(min(max(vmem_need, 32 * 1024 * 1024), 64 * 1024 * 1024))

    cost = pl.CostEstimate(
        flops=2 * b_pad * c_pad * d,
        bytes_accessed=(grid[0] * c_pad * d * itemsize      # weight re-read per B tile
                        + grid[1] * b_pad * d * itemsize    # x re-read per C tile
                        + b_pad * c_pad * 4 + b_pad * 4),
        transcendentals=0)

    out_pad = pl.pallas_call(
        kernel,
        out_shape=jax.ShapeDtypeStruct((b_pad, c_pad), jnp.float32),
        grid=grid,
        in_specs=[
            pl.BlockSpec((tile_b, d), lambda i, j: (i, 0)),
            pl.BlockSpec((tile_c, d), lambda i, j: (j, 0)),
            pl.BlockSpec((tile_b, 1), lambda i, j: (i, 0)),
        ],
        out_specs=pl.BlockSpec((tile_b, tile_c), lambda i, j: (i, j)),
        compiler_params=pltpu.CompilerParams(
            dimension_semantics=("parallel", "parallel"),
            vmem_limit_bytes=vmem_limit),
        cost_estimate=cost,
    )(xn, wn, lbl_p)

    return out_pad[:b, :c]


def _xavier_uniform(key, shape, dtype=jnp.float32):
    fan_out, fan_in = shape
    bound = math.sqrt(6.0 / (fan_in + fan_out))
    return jax.random.uniform(key, shape, dtype, minval=-bound, maxval=bound)


if __name__ == "__main__":
    B, IN_FEATURES, OUT_FEATURES = 8, 32, 16
    S, M = 30.0, 0.5

    key = jax.random.PRNGKey(0)
    kx, kw, kl = jax.random.split(key, 3)

    x = jax.random.normal(kx, (B, IN_FEATURES), dtype=jnp.float32)
    weight = _xavier_uniform(kw, (OUT_FEATURES, IN_FEATURES))
    label = jax.random.randint(kl, (B,), 0, OUT_FEATURES, dtype=jnp.int32)

    out = arc_margin_product(x, weight, label, s=S, m=M,
                             easy_margin=False, ls_eps=0.0)
    jax.block_until_ready(out)

    # Pure-JAX f32 reference (bf16 MXU inputs -> loose tolerance).
    xn_ref = x / jnp.maximum(jnp.linalg.norm(x, axis=1, keepdims=True), 1e-12)
    wn_ref = weight / jnp.maximum(
        jnp.linalg.norm(weight, axis=1, keepdims=True), 1e-12)
    cos_ref = jnp.clip(xn_ref @ wn_ref.T, -1.0, 1.0)
    sin_ref = jnp.sqrt(jnp.maximum(1.0 - cos_ref ** 2, 0.0))
    phi_ref = cos_ref * math.cos(M) - sin_ref * math.sin(M)
    phi_ref = jnp.where(cos_ref > math.cos(math.pi - M), phi_ref,
                        cos_ref - math.sin(math.pi - M) * M)
    onehot_ref = jax.nn.one_hot(label, OUT_FEATURES, dtype=jnp.float32)
    ref = S * (onehot_ref * phi_ref + (1.0 - onehot_ref) * cos_ref)

    assert out.shape == (B, OUT_FEATURES)
    assert jnp.all(jnp.isfinite(out))
    max_err = float(jnp.max(jnp.abs(out - ref)))
    assert max_err < 0.5, f"max abs error {max_err} vs reference"
    print("KERNEL_OK")
</pallas_src>

<mosaic_0001>
module attributes {stable_mosaic.version = 11 : i64} {
  func.func @_l2_normalize_kernel(%arg0: i32, %arg1: memref<8x32xf32, #tpu.memory_space<vmem>>, %arg2: memref<8x32xbf16, #tpu.memory_space<vmem>>) attributes {dimension_semantics = [#tpu.dimension_semantics<parallel>], iteration_bounds = array<i64: 1>, scalar_prefetch = 0 : i64, scratch_operands = 0 : i64, tpu.core_type = #tpu.core_type<tc>, window_params = [{transform_indices = @transform_0, window_bounds = array<i64: 8, 32>}, {transform_indices = @transform_1, window_bounds = array<i64: 8, 32>}]} {
    %c0 = arith.constant 0 : index
    %c0_0 = arith.constant 0 : index
    %0 = vector.load %arg1[%c0, %c0_0] : memref<8x32xf32, #tpu.memory_space<vmem>>, vector<8x32xf32>
    %1 = arith.mulf %0, %0 : vector<8x32xf32>
    %cst = arith.constant dense<0.000000e+00> : vector<8xf32>
    %2 = vector.multi_reduction <add>, %1, %cst [1] : vector<8x32xf32> to vector<8xf32>
    %3 = vector.shape_cast %2 : vector<8xf32> to vector<8x1xf32>
    %cst_1 = arith.constant 1.000000e-24 : f32
    %4 = vector.broadcast %cst_1 : f32 to vector<8x1xf32>
    %5 = arith.maximumf %3, %4 : vector<8x1xf32>
    %6 = math.rsqrt %5 : vector<8x1xf32>
    %7 = vector.broadcast %6 : vector<8x1xf32> to vector<8x32xf32>
    %8 = arith.mulf %0, %7 : vector<8x32xf32>
    %9 = arith.truncf %8 : vector<8x32xf32> to vector<8x32xbf16>
    %c0_2 = arith.constant 0 : index
    %c0_3 = arith.constant 0 : index
    %10 = vector.load %arg2[%c0_2, %c0_3] : memref<8x32xbf16, #tpu.memory_space<vmem>>, vector<8x32xbf16>
    tpu.vector_store %arg2[%c0_2, %c0_3], %9 {strides = array<i32>} : memref<8x32xbf16, #tpu.memory_space<vmem>>, vector<8x32xbf16>,
    return
  }
  func.func @transform_0(%arg0: i32) -> (i32, i32) {
    %c0_i32 = arith.constant 0 : i32
    %c0_i32_0 = arith.constant 0 : i32
    return %arg0, %c0_i32 : i32, i32
  }
  func.func @transform_1(%arg0: i32) -> (i32, i32) {
    %c0_i32 = arith.constant 0 : i32
    %c0_i32_0 = arith.constant 0 : i32
    return %arg0, %c0_i32 : i32, i32
  }
}

</mosaic_0001>

<llo_original>
// kernel: tpu_custom_call.1
$region0: #{tpu_custom_call.1}
  #allocation0 [shape = 'u32[]', space=smem, size = 0x4, offset = 0x4, fixed_abs, tag = 'smem constant byte address 0x4 - core index']
  #allocation1 [shape = 'u32[72,128]{1,0:T(1,128)}', space=vmem, size = 0x9000, scoped, tag = 'internal scratch']
  %s0 = inlined_call_operand.hbm [shape: f32[8,32], index: 0, kind: input, shape index: {}]
  %s1 = inlined_call_operand.hbm [shape: bf16[8,32], index: 1, kind: output, shape index: {}]
  %s2 = sld [smem:[#allocation0]]
  $region18: #{tpu_custom_call.1} parent=0
    _
  %s4 = ssub.s32 1, %s2
  %s5 = scalar_select 0, %s4, %s2
  $region1: #{tpu_custom_call.1} parent=0
    #allocation2 [shape = 'u8[4096]{0}', space=vmem, size = 0x1000, scoped, tag = 'input window, operand 0, single buffered']
    #allocation3 [shape = 's32[1]{0}', space=sflag, size = 0x4, scoped, tag = 'scoped memory for tpu_custom_call.1']
    #allocation4 [shape = 's32[1]{0}', space=sflag, size = 0x4, scoped, tag = 'scoped memory for tpu_custom_call.1']
    #allocation5 [shape = 'u8[2048]{0}', space=vmem, size = 0x800, scoped, tag = 'output window, operand 0, single buffered']
    %6 = vsyncpa [#allocation3], 0
    %7 = vsyncpa [#allocation4], 0
    // Predicated region
    $region2: #{tpu_custom_call.1} parent=1 // pred_check
      _
    $region3: #{tpu_custom_call.1} parent=1 // pred_check_branch
      %9 = sbr.rel (0) target = $region5
    $region4: #{tpu_custom_call.1} parent=1 // pred_region
      %11 = vsyncadd [#allocation3], 0
      %s13 = sshll.u32 %s0, 4
      %s14 = int_to_ptr.hbm [resolvable:$true] %s13
      %s15 = sshll.u32 [#allocation2], 4
      %s16 = int_to_ptr.vmem [resolvable:$true] %s15
      %18 = dma.hbm_to_vmem [thread:$0]  %s14, 128, %s16, [#allocation3]
    $region5: #{tpu_custom_call.1} parent=1 // pred_fallthru
      _
    // Predicated region
    $region6: #{tpu_custom_call.1} parent=1 // pred_check
      _
    $region7: #{tpu_custom_call.1} parent=1 // pred_check_branch
      %20 = sbr.rel (0) target = $region9
    $region8: #{tpu_custom_call.1} parent=1 // pred_region
      %22 = dma.done [#allocation3], 128
    $region9: #{tpu_custom_call.1} parent=1 // pred_fallthru
      _
    %v23 = vld [vmem:[#allocation2] sm:$0xff]
    %v24 = vmul.f32 %v23, %v23
    %vm25 = vcmask 261120
    %v26 = vsel %vm25, %v24, 0.0
    %27 = vadd.xlane.f32.xlu0 %v26
    %v28 = vpop.xlane.xlu0 %27
    %v29 = vmax.f32 %v28, 1e-24
    %v30 = vrsqrt.pop %v29
    %v31 = vmul.f32 %v30, %v29
    %v32 = vmul.f32 %v31, %v30
    %v33 = vmul.f32 0.5, %v32
    %v34 = vsub.f32 1.5, %v33
    %v35 = vmul.f32 %v30, %v34
    %vm36 = vweird.f32 %v29
    %vm37 = vweird.f32 %v30
    %vm38 = vmor %vm36, %vm37
    %v39 = vsel %vm38, %v30, %v35
    %v40 = vmul.f32 %v23, %v39
    %v41 = vpack.c.bf16 %v40, %v40
    %vm42 = vcmask 257024
    %43 = vst.msk [vmem:[#allocation5] sm:$0xf] %vm42, %v41
    // Predicated region
    $region10: #{tpu_custom_call.1} parent=1 // pred_check
      _
    $region11: #{tpu_custom_call.1} parent=1 // pred_check_branch
      %45 = sbr.rel (0) target = $region13
    $region12: #{tpu_custom_call.1} parent=1 // pred_region
      %47 = vsyncadd [#allocation4], 0
      %s49 = sshll.u32 [#allocation5], 4
      %s50 = int_to_ptr.vmem [resolvable:$true] %s49
      %s51 = sshll.u32 %s1, 4
      %s52 = int_to_ptr.hbm [resolvable:$true] %s51
      %54 = dma.vmem_to_hbm [thread:$0]  %s50, 64, %s52, [#allocation4]
    $region13: #{tpu_custom_call.1} parent=1 // pred_fallthru
      _
    // Predicated region
    $region14: #{tpu_custom_call.1} parent=1 // pred_check
      _
    $region15: #{tpu_custom_call.1} parent=1 // pred_check_branch
      %56 = sbr.rel (0) target = $region17
    $region16: #{tpu_custom_call.1} parent=1 // pred_region
      %58 = dma.done [#allocation4], 64
    $region17: #{tpu_custom_call.1} parent=1 // pred_fallthru
      _
    %59 = vsyncpa [#allocation3], 1
    %60 = vsyncpa [#allocation4], 1

</llo_original>
